<compile_context>
chip_gen: v7x
topology: tpu7x:2x2x1
jax: 0.10.0
libtpu: 0.0.40
codegen_flags: <defaults>
</compile_context>

<pallas_src>
import functools
import math

import jax
import jax.numpy as jnp
from jax.experimental import pallas as pl
from jax.experimental.pallas import tpu as pltpu


def _round_up(a: int, b: int) -> int:
    return (a + b - 1) // b * b


def _vmem_capacity_bytes() -> int:
    """Generation-aware VMEM capacity (128 MiB v5e/v6e, 64 MiB v7x)."""
    try:
        info = pltpu.get_tpu_info()
        for attr in ("vmem_capacity_bytes", "vmem_size_bytes", "vmem_bytes"):
            v = getattr(info, attr, None)
            if v:
                return int(v)
    except Exception:
        pass
    return 64 * 1024 * 1024            # conservative: assume v7x-sized VMEM


def _vmem_needed(tm, tp, n_p, wbufs, E, x_bytes, out_bytes, c_bytes):
    """Rough VMEM bill: Pallas buffers + the in-body (tm, tp) intermediates."""
    wb = 1 if n_p == 1 else wbufs                  # weight-chunk buffer count
    weights = wb * 2 * tp * E * c_bytes            # W1t chunk + W2t chunk
    x_tile = 2 * tm * E * x_bytes                  # double-buffered x tile
    o_tile = 2 * tm * E * out_bytes                # double-buffered out tile
    acc = tm * E * 4 if n_p > 1 else 0             # f32 accumulator scratch
    h_tmp = tm * tp * (4 + c_bytes)                # f32 h + its compute-dtype cast
    bias = wb * tp * 4 + E * 4
    return weights + x_tile + o_tile + acc + h_tmp + bias


# --------------------------------------------------------------------------- #
# One-time parameter preparation (NOT in the per-token hot path).
# --------------------------------------------------------------------------- #
def prepare_ffn_params(w1, b1, w2, b2, *, compute_dtype=jnp.bfloat16):
    """w1:[P,E] b1:[P] w2:[E,P] b2:[E]  (PyTorch nn.Linear layouts).

    Transposes to MXU-friendly layouts, casts once to the compute dtype,
    zero-pads the hidden dim when chunking is needed, and picks the
    hidden-dim chunking + VMEM budget for this TPU generation.
    Use compute_dtype=jnp.float32 for bit-level parity with the f32 reference.
    """
    P, E = w1.shape
    assert w2.shape == (E, P) and b1.shape == (P,) and b2.shape == (E,)

    c_bytes = jnp.dtype(compute_dtype).itemsize
    a_bytes = 4                                    # size activations as f32

    vmem_cap = _vmem_capacity_bytes()
    big_vmem = vmem_cap >= (96 << 20)
    # Scoped limit: leave headroom for compiler-internal scratch / epilogue.
    vmem_limit = vmem_cap - ((24 << 20) if big_vmem else (12 << 20))
    budget = int(vmem_limit * 0.9)

    # Hidden-dim chunking decision (independent of M).  Full residency means
    # the weights are DMA'd exactly once per call -> preferred when it fits.
    tm_probe = 256
    if _vmem_needed(tm_probe, P, 1, 1, E, a_bytes, a_bytes, c_bytes) <= budget:
        tp, n_p = P, 1
    else:
        tp = None
        for cand in ((2048, 1024, 512, 256, 128) if big_vmem
                     else (1024, 512, 256, 128)):
            if cand < P and _vmem_needed(tm_probe, cand, 2, 2, E,
                                         a_bytes, a_bytes, c_bytes) <= budget:
                tp = cand
                break
        if tp is None:
            tp = 128                               # last resort
        n_p = -(-P // tp)
    P_pad = tp * n_p

    # One-time layout work: pre-transpose so both dots are plain
    # (lhs last) x (rhs second-to-last) contractions feeding the MXU, and
    # zero-pad the hidden dim so every chunk is full (zero hidden units
    # contribute exactly 0 through relu and W2).
    w1t = jnp.asarray(w1).T.astype(compute_dtype)            # (E, P)
    w2t = jnp.asarray(w2).T.astype(compute_dtype)            # (P, E)
    b1r = jnp.asarray(b1).reshape(1, P).astype(jnp.float32)
    b2r = jnp.asarray(b2).reshape(1, E).astype(jnp.float32)
    if P_pad != P:
        w1t = jnp.pad(w1t, ((0, 0), (0, P_pad - P)))
        w2t = jnp.pad(w2t, ((0, P_pad - P), (0, 0)))
        b1r = jnp.pad(b1r, ((0, 0), (0, P_pad - P)))

    return dict(w1t=w1t, b1=b1r, w2t=w2t, b2=b2r, E=E, P_pad=P_pad,
                tp=tp, n_p=n_p, compute_dtype=compute_dtype,
                big_vmem=big_vmem, vmem_limit=int(vmem_limit),
                budget=int(budget))


# --------------------------------------------------------------------------- #
# Kernels.
# --------------------------------------------------------------------------- #
def _ffn_kernel_resident(x_ref, w1_ref, b1_ref, w2_ref, b2_ref, o_ref,
                         *, compute_dtype):
    # x:(tm,E)  w1:(E,P)  b1:(1,P)  w2:(P,E)  b2:(1,E)  o:(tm,E)
    x = x_ref[...].astype(compute_dtype)                  # in-kernel cast
    h = jnp.dot(x, w1_ref[...], preferred_element_type=jnp.float32)
    h = jnp.maximum(h + b1_ref[...], 0.0)                 # bias + ReLU in f32
    # dropout (eval mode) -> identity
    y = jnp.dot(h.astype(compute_dtype), w2_ref[...],
                preferred_element_type=jnp.float32)
    o_ref[...] = (y + b2_ref[...]).astype(o_ref.dtype)


def _ffn_kernel_chunked(x_ref, w1_ref, b1_ref, w2_ref, b2_ref, o_ref, acc_ref,
                        *, compute_dtype):
    # Hidden dim split across grid axis 1; acc_ref (tm,E) f32 is resident
    # across that axis and seeded with b2 so the epilogue is a single cast.
    j = pl.program_id(1)

    @pl.when(j == 0)
    def _():
        acc_ref[...] = jnp.broadcast_to(b2_ref[...], acc_ref.shape)

    x = x_ref[...].astype(compute_dtype)
    h = jnp.dot(x, w1_ref[...], preferred_element_type=jnp.float32)
    h = jnp.maximum(h + b1_ref[...], 0.0)
    # dropout (eval mode) -> identity
    acc_ref[...] += jnp.dot(h.astype(compute_dtype), w2_ref[...],
                            preferred_element_type=jnp.float32)

    @pl.when(j == pl.num_programs(1) - 1)
    def _():
        o_ref[...] = acc_ref[...].astype(o_ref.dtype)


# --------------------------------------------------------------------------- #
# Per-call hot path.
# --------------------------------------------------------------------------- #
def apply_positionwise_feedforward(x, params):
    """x: [..., E] in its native dtype; params from prepare_ffn_params."""
    E, P_pad = params["E"], params["P_pad"]
    tp, n_p = params["tp"], params["n_p"]
    cdt = params["compute_dtype"]
    big_vmem, budget = params["big_vmem"], params["budget"]

    assert x.shape[-1] == E
    lead = x.shape[:-1]
    M = math.prod(lead)
    out_dtype = x.dtype
    x_bytes = jnp.dtype(x.dtype).itemsize
    c_bytes = jnp.dtype(cdt).itemsize
    row_align = 8 if x_bytes >= 4 else 16

    # ---- pick the M tile ---------------------------------------------------
    if n_p == 1:
        tm_cands = (512, 256, 128) if big_vmem else (384, 256, 128)
    else:
        # Re-streamed weights: arithmetic intensity ~= tm flops/byte, so go
        # big where VMEM allows (v5e/v6e 128 MiB); v7x's HBM only needs ~300.
        tm_cands = (1024, 768, 512, 256, 128) if big_vmem else (384, 256, 128)

    tm_eff = None
    for tm in tm_cands:
        t = min(tm, _round_up(M, row_align))
        if _vmem_needed(t, tp, n_p, 2, E, x_bytes, x_bytes, c_bytes) <= budget:
            tm_eff = t
            break
    if tm_eff is None:
        tm_eff = min(128, _round_up(M, row_align))

    # Keep both v7x TensorCores / megacore busy: >= 2 M tiles when there is
    # enough work for the split to be worthwhile.
    if M >= 256 and tm_eff >= M:
        tm_eff = _round_up(-(-M // 2), row_align)

    M_pad = _round_up(M, tm_eff)
    grid_m = M_pad // tm_eff

    # Extra DMA lookahead on the weight chunks where VMEM leaves room (v5e/v6e).
    wbufs = 2
    if n_p > 1 and big_vmem and _vmem_needed(
            tm_eff, tp, n_p, 3, E, x_bytes, x_bytes, c_bytes) <= budget:
        wbufs = 3

    x2 = x.reshape(M, E)                         # native dtype; cast in-kernel
    if M_pad != M:
        x2 = jnp.pad(x2, ((0, M_pad - M), (0, 0)))

    weight_bytes = 2 * E * P_pad * c_bytes
    cost = pl.CostEstimate(
        flops=4 * M_pad * E * P_pad,             # two matmuls
        transcendentals=0,
        bytes_accessed=(M_pad * E * 2 * x_bytes
                        + (1 if n_p == 1 else grid_m) * weight_bytes
                        + (P_pad + E) * 4),
    )
    compiler_params = pltpu.CompilerParams(
        dimension_semantics=(("parallel",) if n_p == 1
                             else ("parallel", "arbitrary")),
        vmem_limit_bytes=params["vmem_limit"],
    )
    args = (x2, params["w1t"], params["b1"], params["w2t"], params["b2"])

    if n_p == 1:
        # Full weight residency: constant-index, single-buffered weight blocks
        # -> weights DMA'd exactly once per call; no accumulator scratch.
        out = pl.pallas_call(
            functools.partial(_ffn_kernel_resident, compute_dtype=cdt),
            out_shape=jax.ShapeDtypeStruct((M_pad, E), out_dtype),
            grid_spec=pltpu.PrefetchScalarGridSpec(
                num_scalar_prefetch=0,
                grid=(grid_m,),
                in_specs=[
                    pl.BlockSpec((tm_eff, E), lambda i: (i, 0)),
                    pl.BlockSpec((E, P_pad), lambda i: (0, 0),
                                 pipeline_mode=pl.Buffered(1)),
                    pl.BlockSpec((1, P_pad), lambda i: (0, 0),
                                 pipeline_mode=pl.Buffered(1)),
                    pl.BlockSpec((P_pad, E), lambda i: (0, 0),
                                 pipeline_mode=pl.Buffered(1)),
                    pl.BlockSpec((1, E), lambda i: (0, 0),
                                 pipeline_mode=pl.Buffered(1)),
                ],
                out_specs=pl.BlockSpec((tm_eff, E), lambda i: (i, 0)),
            ),
            compiler_params=compiler_params,
            cost_estimate=cost,
        )(*args)
    else:
        out = pl.pallas_call(
            functools.partial(_ffn_kernel_chunked, compute_dtype=cdt),
            out_shape=jax.ShapeDtypeStruct((M_pad, E), out_dtype),
            grid_spec=pltpu.PrefetchScalarGridSpec(
                num_scalar_prefetch=0,
                grid=(grid_m, n_p),
                in_specs=[
                    pl.BlockSpec((tm_eff, E), lambda i, j: (i, 0)),
                    pl.BlockSpec((E, tp), lambda i, j: (0, j),
                                 pipeline_mode=pl.Buffered(wbufs)),
                    pl.BlockSpec((1, tp), lambda i, j: (0, j),
                                 pipeline_mode=pl.Buffered(wbufs)),
                    pl.BlockSpec((tp, E), lambda i, j: (j, 0),
                                 pipeline_mode=pl.Buffered(wbufs)),
                    pl.BlockSpec((1, E), lambda i, j: (0, 0),
                                 pipeline_mode=pl.Buffered(1)),
                ],
                out_specs=pl.BlockSpec((tm_eff, E), lambda i, j: (i, 0)),
                scratch_shapes=[pltpu.VMEM((tm_eff, E), jnp.float32)],
            ),
            compiler_params=compiler_params,
            cost_estimate=cost,
        )(*args)

    if M_pad != M:
        out = out[:M]
    return out.reshape(*lead, E)


def positionwise_feedforward(x, w1, b1, w2, b2, **prep_kwargs):
    """One-shot convenience API.  For repeated calls, run prepare_ffn_params
    once (weight transpose/cast/pad happens once) and call
    apply_positionwise_feedforward in the hot loop."""
    return apply_positionwise_feedforward(
        x, prepare_ffn_params(w1, b1, w2, b2, **prep_kwargs))


if __name__ == "__main__":
    # Small shapes consistent with the module's forward: x is [batch, seq, embed_dim].
    batch, seq, embed_dim, pf_dim = 2, 8, 32, 64
    dropout_p = 0.1      # eval mode -> identity

    key = jax.random.PRNGKey(0)
    kx, k1, k2, k3, k4 = jax.random.split(key, 5)

    x = jax.random.normal(kx, (batch, seq, embed_dim), dtype=jnp.float32)

    # PyTorch nn.Linear parameter layouts / init bounds.
    bound1 = 1.0 / math.sqrt(embed_dim)
    w1 = jax.random.uniform(k1, (pf_dim, embed_dim), jnp.float32, -bound1, bound1)
    b1 = jax.random.uniform(k2, (pf_dim,), jnp.float32, -bound1, bound1)
    bound2 = 1.0 / math.sqrt(pf_dim)
    w2 = jax.random.uniform(k3, (embed_dim, pf_dim), jnp.float32, -bound2, bound2)
    b2 = jax.random.uniform(k4, (embed_dim,), jnp.float32, -bound2, bound2)

    # One-time weight prep, then the hot-path apply.
    params = prepare_ffn_params(w1, b1, w2, b2)
    out = apply_positionwise_feedforward(x, params)
    out = jax.block_until_ready(out)

    # Pure-JAX f32 reference; kernel matmuls run in bf16 -> loosened tolerance.
    ref = jnp.maximum(x @ w1.T + b1, 0.0) @ w2.T + b2
    assert out.shape == (batch, seq, embed_dim)
    assert out.dtype == x.dtype
    assert jnp.allclose(out, ref, atol=2e-2, rtol=2e-2), (
        "max abs err = %f" % float(jnp.max(jnp.abs(out - ref))))

    print("KERNEL_OK")
</pallas_src>

<mosaic_0001>
module attributes {stable_mosaic.version = 11 : i64} {
  func.func @_ffn_kernel_resident(%arg0: i32, %arg1: memref<16x32xf32, #tpu.memory_space<vmem>>, %arg2: memref<32x64xbf16, #tpu.memory_space<vmem>>, %arg3: memref<1x64xf32, #tpu.memory_space<vmem>>, %arg4: memref<64x32xbf16, #tpu.memory_space<vmem>>, %arg5: memref<1x32xf32, #tpu.memory_space<vmem>>, %arg6: memref<16x32xf32, #tpu.memory_space<vmem>>) attributes {dimension_semantics = [#tpu.dimension_semantics<parallel>], iteration_bounds = array<i64: 1>, scalar_prefetch = 0 : i64, scratch_operands = 0 : i64, tpu.core_type = #tpu.core_type<tc>, window_params = [{transform_indices = @transform_0, window_bounds = array<i64: 16, 32>}, {pipeline_mode = #tpu.pipeline_mode<synchronous>, transform_indices = @transform_1, window_bounds = array<i64: 32, 64>}, {pipeline_mode = #tpu.pipeline_mode<synchronous>, transform_indices = @transform_2, window_bounds = array<i64: 1, 64>}, {pipeline_mode = #tpu.pipeline_mode<synchronous>, transform_indices = @transform_3, window_bounds = array<i64: 64, 32>}, {pipeline_mode = #tpu.pipeline_mode<synchronous>, transform_indices = @transform_4, window_bounds = array<i64: 1, 32>}, {transform_indices = @transform_5, window_bounds = array<i64: 16, 32>}]} {
    %c0 = arith.constant 0 : index
    %c0_0 = arith.constant 0 : index
    %0 = vector.load %arg1[%c0, %c0_0] : memref<16x32xf32, #tpu.memory_space<vmem>>, vector<16x32xf32>
    %1 = arith.truncf %0 : vector<16x32xf32> to vector<16x32xbf16>
    %c0_1 = arith.constant 0 : index
    %c0_2 = arith.constant 0 : index
    %2 = vector.load %arg2[%c0_1, %c0_2] : memref<32x64xbf16, #tpu.memory_space<vmem>>, vector<32x64xbf16>
    %cst = arith.constant dense<0.000000e+00> : vector<16x64xf32>
    %3 = tpu.matmul %1, %2, %cst {dimension_numbers = #tpu.dot_dimension_numbers<[1], [0], [0], [1], [0, 0, 1, 1], [], []>} : vector<16x32xbf16>, vector<32x64xbf16>, vector<16x64xf32> -> vector<16x64xf32>
    %c0_3 = arith.constant 0 : index
    %c0_4 = arith.constant 0 : index
    %4 = vector.load %arg3[%c0_3, %c0_4] : memref<1x64xf32, #tpu.memory_space<vmem>>, vector<1x64xf32>
    %5 = vector.broadcast %4 : vector<1x64xf32> to vector<16x64xf32>
    %6 = arith.addf %3, %5 : vector<16x64xf32>
    %cst_5 = arith.constant 0.000000e+00 : f32
    %7 = vector.broadcast %cst_5 : f32 to vector<16x64xf32>
    %8 = arith.maximumf %6, %7 : vector<16x64xf32>
    %9 = arith.truncf %8 : vector<16x64xf32> to vector<16x64xbf16>
    %c0_6 = arith.constant 0 : index
    %c0_7 = arith.constant 0 : index
    %10 = vector.load %arg4[%c0_6, %c0_7] : memref<64x32xbf16, #tpu.memory_space<vmem>>, vector<64x32xbf16>
    %cst_8 = arith.constant dense<0.000000e+00> : vector<16x32xf32>
    %11 = tpu.matmul %9, %10, %cst_8 {dimension_numbers = #tpu.dot_dimension_numbers<[1], [0], [0], [1], [0, 0, 1, 1], [], []>} : vector<16x64xbf16>, vector<64x32xbf16>, vector<16x32xf32> -> vector<16x32xf32>
    %c0_9 = arith.constant 0 : index
    %c0_10 = arith.constant 0 : index
    %12 = vector.load %arg5[%c0_9, %c0_10] : memref<1x32xf32, #tpu.memory_space<vmem>>, vector<1x32xf32>
    %13 = vector.broadcast %12 : vector<1x32xf32> to vector<16x32xf32>
    %14 = arith.addf %11, %13 : vector<16x32xf32>
    %c0_11 = arith.constant 0 : index
    %c0_12 = arith.constant 0 : index
    %15 = vector.load %arg6[%c0_11, %c0_12] : memref<16x32xf32, #tpu.memory_space<vmem>>, vector<16x32xf32>
    tpu.vector_store %arg6[%c0_11, %c0_12], %14 {strides = array<i32>} : memref<16x32xf32, #tpu.memory_space<vmem>>, vector<16x32xf32>,
    return
  }
  func.func @transform_0(%arg0: i32) -> (i32, i32) {
    %c0_i32 = arith.constant 0 : i32
    %c0_i32_0 = arith.constant 0 : i32
    return %arg0, %c0_i32 : i32, i32
  }
  func.func @transform_1(%arg0: i32) -> (i32, i32) {
    %c0_i32 = arith.constant 0 : i32
    %c0_i32_0 = arith.constant 0 : i32
    %c0_i32_1 = arith.constant 0 : i32
    return %c0_i32, %c0_i32_0 : i32, i32
  }
  func.func @transform_2(%arg0: i32) -> (i32, i32) {
    %c0_i32 = arith.constant 0 : i32
    %c0_i32_0 = arith.constant 0 : i32
    %c0_i32_1 = arith.constant 0 : i32
    return %c0_i32, %c0_i32_0 : i32, i32
  }
  func.func @transform_3(%arg0: i32) -> (i32, i32) {
    %c0_i32 = arith.constant 0 : i32
    %c0_i32_0 = arith.constant 0 : i32
    %c0_i32_1 = arith.constant 0 : i32
    return %c0_i32, %c0_i32_0 : i32, i32
  }
  func.func @transform_4(%arg0: i32) -> (i32, i32) {
    %c0_i32 = arith.constant 0 : i32
    %c0_i32_0 = arith.constant 0 : i32
    %c0_i32_1 = arith.constant 0 : i32
    return %c0_i32, %c0_i32_0 : i32, i32
  }
  func.func @transform_5(%arg0: i32) -> (i32, i32) {
    %c0_i32 = arith.constant 0 : i32
    %c0_i32_0 = arith.constant 0 : i32
    return %arg0, %c0_i32 : i32, i32
  }
}

</mosaic_0001>

<llo_original>
// kernel: tpu_custom_call.1
$region0: #{tpu_custom_call.1}
  #allocation0 [shape = 'u32[]', space=smem, size = 0x4, offset = 0x4, fixed_abs, tag = 'smem constant byte address 0x4 - core index']
  #allocation1 [shape = 'u32[144,128]{1,0:T(1,128)}', space=vmem, size = 0x12000, scoped, tag = 'internal scratch']
  %s0 = inlined_call_operand.vmem [shape: f32[16,32], index: 0, kind: input, shape index: {}]
  %s1 = inlined_call_operand.vmem [shape: bf16[32,64], index: 1, kind: input, shape index: {}]
  %s2 = inlined_call_operand.vmem [shape: f32[1,64], index: 2, kind: input, shape index: {}]
  %s3 = inlined_call_operand.vmem [shape: bf16[64,32], index: 3, kind: input, shape index: {}]
  %s4 = inlined_call_operand.vmem [shape: f32[1,32], index: 4, kind: input, shape index: {}]
  %s5 = inlined_call_operand.hbm [shape: f32[16,32], index: 5, kind: output, shape index: {}]
  %s6 = sld [smem:[#allocation0]]
  $region30: #{tpu_custom_call.1} parent=0
    _
  %s8 = ssub.s32 1, %s6
  %s9 = scalar_select 0, %s8, %s6
  $region1: #{tpu_custom_call.1} parent=0
    #allocation2 [shape = 'u8[8192]{0}', space=vmem, size = 0x2000, scoped, tag = 'output window, operand 0, single buffered']
    #allocation3 [shape = 's32[1]{0}', space=sflag, size = 0x4, scoped, tag = 'scoped memory for tpu_custom_call.1']
    %10 = vsyncpa [#allocation3], 0
    // Predicated region
    $region2: #{tpu_custom_call.1} parent=1 // pred_check
      _
    $region3: #{tpu_custom_call.1} parent=1 // pred_check_branch
      %12 = sbr.rel (0) target = $region5
    $region4: #{tpu_custom_call.1} parent=1 // pred_region
      _
    $region5: #{tpu_custom_call.1} parent=1 // pred_fallthru
      _
    // Predicated region
    $region6: #{tpu_custom_call.1} parent=1 // pred_check
      _
    $region7: #{tpu_custom_call.1} parent=1 // pred_check_branch
      %14 = sbr.rel (0) target = $region9
    $region8: #{tpu_custom_call.1} parent=1 // pred_region
      _
    $region9: #{tpu_custom_call.1} parent=1 // pred_fallthru
      _
    // Predicated region
    $region10: #{tpu_custom_call.1} parent=1 // pred_check
      _
    $region11: #{tpu_custom_call.1} parent=1 // pred_check_branch
      %16 = sbr.rel (0) target = $region13
    $region12: #{tpu_custom_call.1} parent=1 // pred_region
      _
    $region13: #{tpu_custom_call.1} parent=1 // pred_fallthru
      _
    // Predicated region
    $region14: #{tpu_custom_call.1} parent=1 // pred_check
      _
    $region15: #{tpu_custom_call.1} parent=1 // pred_check_branch
      %18 = sbr.rel (0) target = $region17
    $region16: #{tpu_custom_call.1} parent=1 // pred_region
      _
    $region17: #{tpu_custom_call.1} parent=1 // pred_fallthru
      _
    // Predicated region
    $region18: #{tpu_custom_call.1} parent=1 // pred_check
      _
    $region19: #{tpu_custom_call.1} parent=1 // pred_check_branch
      %20 = sbr.rel (0) target = $region21
    $region20: #{tpu_custom_call.1} parent=1 // pred_region
      _
    $region21: #{tpu_custom_call.1} parent=1 // pred_fallthru
      _
    %v22 = vld [vmem:[%s0] sm:$0xff]
    %v23 = vld [vmem:[%s0 + $0x8] sm:$0xff]
    %v24 = vpack.c.bf16 %v23, %v22
    %v25 = vld [vmem:[%s1] sm:$0xf]
    %v26 = vld [vmem:[%s1 + $0x4] sm:$0xf]
    %v27 = vld [vmem:[%s1 + $0x8] sm:$0xf]
    %v28 = vld [vmem:[%s1 + $0xc] sm:$0xf]
    %v29 = vld [vmem:[%s2] sm:$0x1]
    %v31 = vlaneseq
    %v32 = vshrl.u32 %v31, 7
    %v33 = vsub.s32 0, %v32
    %v34 = vrot.slane %v29, %v33
    %v40 = vunpack.c.l.b16 %v25
    %v41 = vunpack.c.l.b16 %v26
    %v42 = vunpack.c.l.b16 %v27
    %v43 = vunpack.c.l.b16 %v28
    %v44 = vpack.c.b16 %v41, %v40
    %v45 = vpack.c.b16 %v43, %v42
    %vm48 = vcmask 261120
    %v50 = vsel %vm48, %v24, 0
    %52 = vmatprep.subr.bf16.mxu0 0
    %53 = vmatpush1.bf16.msra.mxu0 %v44
    %54 = vmatprep.subr.bf16.mxu0 0
    %55 = vmatpush1.bf16.msra.mxu0 %v45
    %56 = vmatprep.subr.bf16.mxu0 0
    %57 = vmatpush1.bf16.msra.mxu0 0
    %58 = vmatprep.subr.bf16.mxu0 0
    %59 = vmatpush1.bf16.msra.mxu0 0
    %60 = vmatprep.subr.bf16.mxu0 0
    %61 = vmatpush1.bf16.msra.mxu0 0
    %62 = vmatprep.subr.bf16.mxu0 0
    %63 = vmatpush1.bf16.msra.mxu0 0
    %64 = vmatprep.subr.bf16.mxu0 0
    %65 = vmatpush1.bf16.msra.mxu0 0
    %66 = vmatprep.subr.bf16.mxu0 0
    %67 = vmatpush1.bf16.msra.mxu0 0
    %68 = vmatprep.subr.bf16.mxu0 0
    %69 = vmatpush1.bf16.msra.mxu0 0
    %70 = vmatprep.subr.bf16.mxu0 0
    %71 = vmatpush1.bf16.msra.mxu0 0
    %72 = vmatprep.subr.bf16.mxu0 0
    %73 = vmatpush1.bf16.msra.mxu0 0
    %74 = vmatprep.subr.bf16.mxu0 0
    %75 = vmatpush1.bf16.msra.mxu0 0
    %76 = vmatprep.subr.bf16.mxu0 0
    %77 = vmatpush1.bf16.msra.mxu0 0
    %78 = vmatprep.subr.bf16.mxu0 0
    %79 = vmatpush1.bf16.msra.mxu0 0
    %80 = vmatprep.subr.bf16.mxu0 0
    %81 = vmatpush1.bf16.msra.mxu0 0
    %82 = vmatprep.subr.bf16.mxu0 0
    %83 = vmatpush1.bf16.msra.mxu0 0
    %84 = vmatprep.mubr.bf16.mxu0 0
    %85 = vmatmul.mubr.bf16.gmra.mrb[0].mxu0 %v50
    %v86 = vpop.f32.mrb[0].mxu0
    %v87 = vadd.f32 %v34, %v86
    %v88 = vpop.f32.mrb[0].mxu0
    %v89 = vpop.f32.mrb[0].mxu0
    %v90 = vadd.f32 %v34, %v89
    %v91 = vpop.f32.mrb[0].mxu0
    %92 = vdwg.mxu0
    %v93 = vmax.f32 %v87, 0.0
    %v94 = vmax.f32 %v90, 0.0
    %v95 = vpack.c.bf16 %v94, %v93
    %v96 = vld [vmem:[%s3] sm:$0xf]
    %v97 = vld [vmem:[%s3 + $0x4] sm:$0xf]
    %v98 = vld [vmem:[%s3 + $0x8] sm:$0xf]
    %v99 = vld [vmem:[%s3 + $0xc] sm:$0xf]
    %v100 = vld [vmem:[%s3 + $0x10] sm:$0xf]
    %v101 = vld [vmem:[%s3 + $0x14] sm:$0xf]
    %v102 = vld [vmem:[%s3 + $0x18] sm:$0xf]
    %v103 = vld [vmem:[%s3 + $0x1c] sm:$0xf]
    %v104 = vld [vmem:[%s4] sm:$0x1]
    %v106 = vlaneseq
    %v107 = vshrl.u32 %v106, 7
    %v108 = vsub.s32 0, %v107
    %v109 = vrot.slane %v104, %v108
    %v119 = vunpack.c.l.b16 %v96
    %v120 = vunpack.c.l.b16 %v97
    %v121 = vunpack.c.l.b16 %v98
    %v122 = vunpack.c.l.b16 %v99
    %v123 = vunpack.c.l.b16 %v100
    %v124 = vunpack.c.l.b16 %v101
    %v125 = vunpack.c.l.b16 %v102
    %v126 = vunpack.c.l.b16 %v103
    %v127 = vpack.c.b16 %v120, %v119
    %v128 = vpack.c.b16 %v122, %v121
    %v129 = vpack.c.b16 %v124, %v123
    %v130 = vpack.c.b16 %v126, %v125
    %vm135 = vcmask 523264
    %v137 = vsel %vm135, %v95, 0
    %139 = vmatprep.subr.bf16.mxu0 0
    %140 = vmatpush1.bf16.msra.mxu0 %v127
    %141 = vmatprep.subr.bf16.mxu0 0
    %142 = vmatpush1.bf16.msra.mxu0 %v128
    %143 = vmatprep.subr.bf16.mxu0 0
    %144 = vmatpush1.bf16.msra.mxu0 %v129
    %145 = vmatprep.subr.bf16.mxu0 0
    %146 = vmatpush1.bf16.msra.mxu0 %v130
    %147 = vmatprep.subr.bf16.mxu0 0
    %148 = vmatpush1.bf16.msra.mxu0 0
    %149 = vmatprep.subr.bf16.mxu0 0
    %150 = vmatpush1.bf16.msra.mxu0 0
    %151 = vmatprep.subr.bf16.mxu0 0
    %152 = vmatpush1.bf16.msra.mxu0 0
    %153 = vmatprep.subr.bf16.mxu0 0
    %154 = vmatpush1.bf16.msra.mxu0 0
    %155 = vmatprep.subr.bf16.mxu0 0
    %156 = vmatpush1.bf16.msra.mxu0 0
    %157 = vmatprep.subr.bf16.mxu0 0
    %158 = vmatpush1.bf16.msra.mxu0 0
    %159 = vmatprep.subr.bf16.mxu0 0
    %160 = vmatpush1.bf16.msra.mxu0 0
    %161 = vmatprep.subr.bf16.mxu0 0
    %162 = vmatpush1.bf16.msra.mxu0 0
    %163 = vmatprep.subr.bf16.mxu0 0
    %164 = vmatpush1.bf16.msra.mxu0 0
    %165 = vmatprep.subr.bf16.mxu0 0
    %166 = vmatpush1.bf16.msra.mxu0 0
    %167 = vmatprep.subr.bf16.mxu0 0
    %168 = vmatpush1.bf16.msra.mxu0 0
    %169 = vmatprep.subr.bf16.mxu0 0
    %170 = vmatpush1.bf16.msra.mxu0 0
    %171 = vmatprep.mubr.bf16.mxu0 0
    %172 = vmatmul.mubr.bf16.gmra.mrb[0].mxu0 %v137
    %v173 = vpop.f32.mrb[0].mxu0
    %v174 = vadd.f32 %v109, %v173
    %v175 = vpop.f32.mrb[0].mxu0
    %v176 = vpop.f32.mrb[0].mxu0
    %v177 = vadd.f32 %v109, %v176
    %v178 = vpop.f32.mrb[0].mxu0
    %179 = vdwg.mxu0
    %180 = vst.msk [vmem:[#allocation2] sm:$0xff] %vm48, %v174
    %181 = vst.msk [vmem:[#allocation2 + $0x8] sm:$0xff] %vm48, %v177
    // Predicated region
    $region22: #{tpu_custom_call.1} parent=1 // pred_check
      _
    $region23: #{tpu_custom_call.1} parent=1 // pred_check_branch
      %183 = sbr.rel (0) target = $region25
    $region24: #{tpu_custom_call.1} parent=1 // pred_region
      %s185 = ssub.s32 256, 256
      %186 = vsyncadd [#allocation3], %s185
      %s187 = sshll.u32 [#allocation2], 4
      %s188 = int_to_ptr.vmem [resolvable:$true] %s187
      %193 = dma.vmem_to_hbm [thread:$0]  %s188, 256, %s5, [#allocation3], 128, 128, 8
    $region25: #{tpu_custom_call.1} parent=1 // pred_fallthru
      _
    // Predicated region
    $region26: #{tpu_custom_call.1} parent=1 // pred_check
      _
    $region27: #{tpu_custom_call.1} parent=1 // pred_check_branch
      %195 = sbr.rel (0) target = $region29
    $region28: #{tpu_custom_call.1} parent=1 // pred_region
      %196 = dma.done [#allocation3], 256
    $region29: #{tpu_custom_call.1} parent=1 // pred_fallthru
      _
    %197 = vsyncpa [#allocation3], 1

</llo_original>
